<compile_context>
chip_gen: v7x
topology: tpu7x:2x2x1
jax: 0.10.0
libtpu: 0.0.40
codegen_flags: <defaults>
</compile_context>

<pallas_src>
import math

import jax
import jax.numpy as jnp
from jax import lax
from jax.experimental import pallas as pl
from jax.experimental.pallas import tpu as pltpu


def _upsample_kernel(x_ref, w_ref, b_ref, o_ref):
    """One (row-tile, kh) grid step.

    x_ref: (tm, C_in)            tm = th*W tokens (th whole image rows)
    w_ref: (2, C_in, 2*C_out)    grid-invariant, columns ordered kw*C_out + oc
    b_ref: (2, 1, 2*C_out)       grid-invariant (f32)
    o_ref: (th, 1, W, 2*C_out)   output slab for this (row tile, kh)
    """
    kh = pl.program_id(1)
    acc = jnp.dot(x_ref[...], w_ref[kh],
                  preferred_element_type=jnp.float32)      # (tm, 2*C_out), f32
    acc = acc + b_ref[kh]                                   # broadcast (1, 2*C_out)
    # (th*W, 2*C_out) -> (th, 1, W, 2*C_out): pure leading-dim split (lane dim
    # unchanged); layout-trivial when W is a multiple of 8 (typical Uformer).
    o_ref[...] = acc.reshape(o_ref.shape).astype(o_ref.dtype)


def _pick_row_tile(n_rows, W, c_in, c_out, in_itemsize, out_itemsize,
                   vmem_budget_bytes, max_tokens=2048):
    """Largest divisor `th` of n_rows whose pipelined working set fits the budget."""
    # Per-image-row VMEM cost of one pipelined step:
    #   x block (2 buffers) + out block (2 buffers) + f32 accumulator.
    per_row = W * (2 * c_in * in_itemsize
                   + 2 * 2 * c_out * out_itemsize
                   + 2 * c_out * 4)
    th_cap = max(1, vmem_budget_bytes // max(per_row, 1))
    th_cap = min(int(th_cap), n_rows, max(1, max_tokens // max(W, 1)))

    best = 1
    best_aligned = 0
    for th in range(1, th_cap + 1):
        if n_rows % th:
            continue
        best = th
        # keep the x block's second-minor dim (tm = th*W) sublane-aligned
        if (th * W) % 8 == 0 or th == n_rows:
            best_aligned = th
    return best_aligned if best_aligned else best


def upsample_forward(x, weight, bias, *, vmem_budget_bytes=24 * 1024 * 1024):
    """Pallas forward pass of Upsample.

    Args:
      x:      (B, L, C_in), L a perfect square.
      weight: (C_in, C_out, 2, 2)  -- torch ConvTranspose2d.weight layout.
      bias:   (C_out,)
    Returns:
      (B, 4*L, C_out)
    """
    B, L, C_in = x.shape
    H = math.isqrt(L)
    W = H
    assert H * W == L, "L must be a perfect square"
    assert weight.shape[0] == C_in and weight.shape[2:] == (2, 2)
    C_out = weight.shape[1]

    # (C_in, C_out, kh, kw) -> (kh, C_in, kw, C_out) -> (2, C_in, 2*C_out)
    w_stack = jnp.transpose(weight, (2, 0, 3, 1)).reshape(2, C_in, 2 * C_out)
    w_stack = w_stack.astype(x.dtype)                      # bf16-friendly MXU operands
    b_stack = jnp.tile(bias.astype(jnp.float32), (2, 1, 2))  # (2, 1, 2*C_out), f32

    n_rows = B * H                     # rows of the flattened (B*H, W) image
    M = n_rows * W                     # = B * L tokens
    x_flat = x.reshape(M, C_in)

    th = _pick_row_tile(n_rows, W, C_in, C_out,
                        x.dtype.itemsize, x.dtype.itemsize, vmem_budget_bytes)
    tm = th * W
    n_blocks = n_rows // th

    out = pl.pallas_call(
        _upsample_kernel,
        out_shape=jax.ShapeDtypeStruct((n_rows, 2, W, 2 * C_out), x.dtype),
        grid_spec=pltpu.PrefetchScalarGridSpec(
            num_scalar_prefetch=0,
            grid=(n_blocks, 2),                       # (row tiles, kh) -- kh innermost
            in_specs=[
                # x tile: block index independent of kh -> fetched once per row tile
                pl.BlockSpec((tm, C_in), lambda j, kh: (j, 0)),
                # weights / bias: grid-invariant, resident
                pl.BlockSpec((2, C_in, 2 * C_out), lambda j, kh: (0, 0, 0)),
                pl.BlockSpec((2, 1, 2 * C_out), lambda j, kh: (0, 0, 0)),
            ],
            out_specs=pl.BlockSpec((th, 1, W, 2 * C_out),
                                   lambda j, kh: (j, kh, 0, 0)),
        ),
        compiler_params=pltpu.CompilerParams(
            dimension_semantics=("parallel", "arbitrary"),
            vmem_limit_bytes=48 * 1024 * 1024,
        ),
    )(x_flat, w_stack, b_stack)

    # (B*H, 2, W, 2*C_out) is already contiguous as [b][2h+kh][2w+kw][oc]:
    # the reshape below is free (no HBM transpose).
    return out.reshape(B, 4 * L, C_out)


def upsample_reference(x, weight, bias):
    """Pure-JAX reference (same math, no Pallas) for validation."""
    B, L, C_in = x.shape
    H = math.isqrt(L)
    C_out = weight.shape[1]
    x_sp = x.reshape(B, H, H, C_in)
    y = jnp.einsum("bhwc,codk->bhwdko", x_sp, weight,
                   precision=lax.Precision.HIGHEST) + bias
    y = jnp.transpose(y, (0, 1, 3, 2, 4, 5)).reshape(B, 4 * L, C_out)
    return y


if __name__ == "__main__":
    key = jax.random.PRNGKey(0)
    k1, k2, k3, k4 = jax.random.split(key, 4)

    # Case 1: single row-block grid.  B=2, H=W=8, C_in=32 -> C_out=16.
    B, H, C_in, C_out = 2, 8, 32, 16
    L = H * H
    x = jax.random.normal(k1, (B, L, C_in), dtype=jnp.float32)
    weight = jax.random.normal(k2, (C_in, C_out, 2, 2), dtype=jnp.float32) * 0.1
    bias = jax.random.normal(k3, (C_out,), dtype=jnp.float32) * 0.1

    out = jax.block_until_ready(upsample_forward(x, weight, bias))
    ref = upsample_reference(x, weight, bias)
    assert out.shape == (B, 4 * L, C_out), out.shape
    assert jnp.allclose(out, ref, atol=3e-2, rtol=3e-2), \
        float(jnp.max(jnp.abs(out - ref)))

    # Case 2: force a tiny VMEM budget so the row-tile grid axis has many steps and
    # the pipelined path (x-tile reuse across both kh steps) is exercised.
    B2, H2, C_in2, C_out2 = 2, 16, 16, 8
    L2 = H2 * H2
    x2 = jax.random.normal(k4, (B2, L2, C_in2), dtype=jnp.float32)
    w2 = jax.random.normal(k2, (C_in2, C_out2, 2, 2), dtype=jnp.float32) * 0.1
    b2 = jax.random.normal(k3, (C_out2,), dtype=jnp.float32) * 0.1
    out2 = jax.block_until_ready(
        upsample_forward(x2, w2, b2, vmem_budget_bytes=8 * 1024))
    ref2 = upsample_reference(x2, w2, b2)
    assert out2.shape == (B2, 4 * L2, C_out2), out2.shape
    assert jnp.allclose(out2, ref2, atol=3e-2, rtol=3e-2), \
        float(jnp.max(jnp.abs(out2 - ref2)))

    print("KERNEL_OK")
</pallas_src>

<mosaic_0001>
module attributes {stable_mosaic.version = 11 : i64} {
  func.func @_upsample_kernel(%arg0: i32, %arg1: i32, %arg2: memref<128x32xf32, #tpu.memory_space<vmem>>, %arg3: memref<2x32x32xf32, #tpu.memory_space<vmem>>, %arg4: memref<2x1x32xf32, #tpu.memory_space<vmem>>, %arg5: memref<16x1x8x32xf32, #tpu.memory_space<vmem>>) attributes {dimension_semantics = [#tpu.dimension_semantics<parallel>, #tpu.dimension_semantics<arbitrary>], iteration_bounds = array<i64: 1, 2>, scalar_prefetch = 0 : i64, scratch_operands = 0 : i64, tpu.core_type = #tpu.core_type<tc>, window_params = [{transform_indices = @transform_0, window_bounds = array<i64: 128, 32>}, {pipeline_mode = #tpu.pipeline_mode<synchronous>, transform_indices = @transform_1, window_bounds = array<i64: 2, 32, 32>}, {pipeline_mode = #tpu.pipeline_mode<synchronous>, transform_indices = @transform_2, window_bounds = array<i64: 2, 1, 32>}, {transform_indices = @transform_3, window_bounds = array<i64: 16, 1, 8, 32>}]} {
    %c0 = arith.constant 0 : index
    %c0_0 = arith.constant 0 : index
    %0 = vector.load %arg2[%c0, %c0_0] : memref<128x32xf32, #tpu.memory_space<vmem>>, vector<128x32xf32>
    %1 = arith.index_cast %arg1 : i32 to index
    %c0_1 = arith.constant 0 : index
    %c0_2 = arith.constant 0 : index
    %2 = vector.load %arg3[%1, %c0_1, %c0_2] : memref<2x32x32xf32, #tpu.memory_space<vmem>>, vector<1x32x32xf32>
    %3 = vector.shape_cast %2 : vector<1x32x32xf32> to vector<32x32xf32>
    %cst = arith.constant dense<0.000000e+00> : vector<128x32xf32>
    %4 = tpu.matmul %0, %3, %cst {dimension_numbers = #tpu.dot_dimension_numbers<[1], [0], [0], [1], [0, 0, 1, 1], [], []>} : vector<128x32xf32>, vector<32x32xf32>, vector<128x32xf32> -> vector<128x32xf32>
    %5 = arith.index_cast %arg1 : i32 to index
    %c0_3 = arith.constant 0 : index
    %c0_4 = arith.constant 0 : index
    %6 = vector.load %arg4[%5, %c0_3, %c0_4] : memref<2x1x32xf32, #tpu.memory_space<vmem>>, vector<1x1x32xf32>
    %7 = vector.shape_cast %6 : vector<1x1x32xf32> to vector<1x32xf32>
    %8 = vector.broadcast %7 : vector<1x32xf32> to vector<128x32xf32>
    %9 = arith.addf %4, %8 : vector<128x32xf32>
    %10 = vector.shape_cast %9 : vector<128x32xf32> to vector<16x1x8x32xf32>
    %c0_5 = arith.constant 0 : index
    %c0_6 = arith.constant 0 : index
    %c0_7 = arith.constant 0 : index
    %c0_8 = arith.constant 0 : index
    %11 = vector.load %arg5[%c0_5, %c0_6, %c0_7, %c0_8] : memref<16x1x8x32xf32, #tpu.memory_space<vmem>>, vector<16x1x8x32xf32>
    tpu.vector_store %arg5[%c0_5, %c0_6, %c0_7, %c0_8], %10 {strides = array<i32>} : memref<16x1x8x32xf32, #tpu.memory_space<vmem>>, vector<16x1x8x32xf32>,
    return
  }
  func.func @transform_0(%arg0: i32, %arg1: i32) -> (i32, i32) {
    %c0_i32 = arith.constant 0 : i32
    %c0_i32_0 = arith.constant 0 : i32
    return %arg0, %c0_i32 : i32, i32
  }
  func.func @transform_1(%arg0: i32, %arg1: i32) -> (i32, i32, i32) {
    %c0_i32 = arith.constant 0 : i32
    %c0_i32_0 = arith.constant 0 : i32
    %c0_i32_1 = arith.constant 0 : i32
    %c0_i32_2 = arith.constant 0 : i32
    return %c0_i32, %c0_i32_0, %c0_i32_1 : i32, i32, i32
  }
  func.func @transform_2(%arg0: i32, %arg1: i32) -> (i32, i32, i32) {
    %c0_i32 = arith.constant 0 : i32
    %c0_i32_0 = arith.constant 0 : i32
    %c0_i32_1 = arith.constant 0 : i32
    %c0_i32_2 = arith.constant 0 : i32
    return %c0_i32, %c0_i32_0, %c0_i32_1 : i32, i32, i32
  }
  func.func @transform_3(%arg0: i32, %arg1: i32) -> (i32, i32, i32, i32) {
    %c0_i32 = arith.constant 0 : i32
    %c0_i32_0 = arith.constant 0 : i32
    %c0_i32_1 = arith.constant 0 : i32
    return %arg0, %arg1, %c0_i32, %c0_i32_0 : i32, i32, i32, i32
  }
}

</mosaic_0001>

<llo_original>
// kernel: tpu_custom_call.1
$region0: #{tpu_custom_call.1}
  #allocation0 [shape = 'u32[]', space=smem, size = 0x4, offset = 0x4, fixed_abs, tag = 'smem constant byte address 0x4 - core index']
  #allocation1 [shape = 'u32[144,128]{1,0:T(1,128)}', space=vmem, size = 0x12000, scoped, tag = 'internal scratch']
  %s0 = inlined_call_operand.vmem [shape: f32[128,32], index: 0, kind: input, shape index: {}]
  %s1 = inlined_call_operand.vmem [shape: f32[2,32,32], index: 1, kind: input, shape index: {}]
  %s2 = inlined_call_operand.vmem [shape: f32[2,1,32], index: 2, kind: input, shape index: {}]
  %s3 = inlined_call_operand.hbm [shape: f32[16,2,8,32], index: 3, kind: output, shape index: {}]
  %s4 = sld [smem:[#allocation0]]
  $region45: #{tpu_custom_call.1} parent=0
    _
  %s6 = ssub.s32 1, %s4
  %s7 = scalar_select 0, %s6, %s4
  $region1: #{tpu_custom_call.1} parent=0
    #allocation2 [shape = 'u8[131072]{0}', space=vmem, size = 0x20000, scoped, tag = 'output window, operand 0']
    #allocation3 [shape = 's32[2]{0}', space=sflag, size = 0x8, scoped, tag = 'scoped memory for tpu_custom_call.1']
    %8 = vsyncpa [#allocation3], 0
    %s9 = scalar_lea.sflag [#allocation3], 1
    %10 = vsyncpa %s9, 0
    loop: start=0, step=1, limit=4
    $region2: #{tpu_custom_call.1} parent=1 // loop_pre_header
      _
    $region3: #{tpu_custom_call.1} parent=1 // loop_header
      %s12 = sphi 0, %s16
      %p13 = scmp.ge.s32.totalorder %s12, 4
      %s19 = sphi 0, %s31
      %s20 = sphi 0, %s27
      %s21 = sphi 0, %s19
      %s22 = sphi 0, %s20
      %s23 = sphi 0, %s21
      %s24 = sphi 0, %s22
      %s34 = sphi 0, %s36
      %s37 = sphi 0, %s34
      %s38 = sphi 0, %s37
      %s54 = sphi 0, %s38
      %s58 = sphi 0, %s58
      %s60 = sphi 0, %s58
      %s61 = sphi 0, %s60
      %s75 = sphi 0, %s61
      %s79 = sphi 0, %s79
      %s81 = sphi 0, %s79
      %s82 = sphi 0, %s81
      %s96 = sphi 0, %s82
      %s104 = sphi 0, %s106
      %s107 = sphi 0, %s104
      %s108 = sphi 0, %s107
      %s124 = sphi 0, %s108
    $region4: #{tpu_custom_call.1} parent=1 // loop_header_branch
      %15 = sbr.rel (%p13) target = $region8
    $region5: #{tpu_custom_call.1} parent=1 // loop_body
      %s17 = ssub.s32 %s12, 1
      %s18 = ssub.s32 %s12, 2
      %s25 = sadd.s32 1, %s20
      %p26 = scmp.ge.s32.totalorder %s25, 2
      %s27 = scalar_select %p26, 0, %s25
      %s28 = sadd.s32 1, %s19
      %s29 = scalar_select %p26, %s28, %s19
      %p30 = scmp.ge.s32.totalorder %s29, 1
      %s31 = scalar_select %p30, 0, %s29
      %s32 = ssub.s32 %s19, %s31
      %p33 = scmp.eq.s32.totalorder %s32, 0
      %s35 = sadd.s32 %s34, 1
      %s36 = scalar_select %p33, %s34, %s35
      %p39 = pneg %p33
      %p40 = scmp.eq.s32.totalorder %s12, 1
      %p41 = por %p39, %p40
      %p42 = scmp.ne.s32.totalorder %s34, %s37
      %p43 = scmp.eq.s32.totalorder %s12, 0
      %p44 = por %p42, %p43
      %p45 = scmp.ne.s32.totalorder %s34, %s37
      %p46 = scmp.eq.s32.totalorder %s17, 1
      %p47 = por %p45, %p46
      %p48 = scmp.ne.s32.totalorder %s37, %s38
      %p49 = scmp.eq.s32.totalorder %s17, 0
      %p50 = por %p48, %p49
      %p51 = scmp.ne.s32.totalorder %s37, %s38
      %p52 = scmp.eq.s32.totalorder %s18, 1
      %p53 = por %p51, %p52
      %p55 = scmp.ne.s32.totalorder %s38, %s54
      %p56 = scmp.eq.s32.totalorder %s18, 0
      %p57 = por %p55, %p56
      %s59 = sadd.s32 %s58, 1
      %p62 = scmp.eq.s32.totalorder %s12, 1
      %p63 = scmp.ne.s32.totalorder %s58, %s60
      %p64 = scmp.eq.s32.totalorder %s12, 0
      %p65 = por %p63, %p64
      %p66 = scmp.ne.s32.totalorder %s58, %s60
      %p67 = scmp.eq.s32.totalorder %s17, 1
      %p68 = por %p66, %p67
      %p69 = scmp.ne.s32.totalorder %s60, %s61
      %p70 = scmp.eq.s32.totalorder %s17, 0
      %p71 = por %p69, %p70
      %p72 = scmp.ne.s32.totalorder %s60, %s61
      %p73 = scmp.eq.s32.totalorder %s18, 1
      %p74 = por %p72, %p73
      %p76 = scmp.ne.s32.totalorder %s61, %s75
      %p77 = scmp.eq.s32.totalorder %s18, 0
      %p78 = por %p76, %p77
      %s80 = sadd.s32 %s79, 1
      %p83 = scmp.eq.s32.totalorder %s12, 1
      %p84 = scmp.ne.s32.totalorder %s79, %s81
      %p85 = scmp.eq.s32.totalorder %s12, 0
      %p86 = por %p84, %p85
      %p87 = scmp.ne.s32.totalorder %s79, %s81
      %p88 = scmp.eq.s32.totalorder %s17, 1
      %p89 = por %p87, %p88
      %p90 = scmp.ne.s32.totalorder %s81, %s82
      %p91 = scmp.eq.s32.totalorder %s17, 0
      %p92 = por %p90, %p91
      %p93 = scmp.ne.s32.totalorder %s81, %s82
      %p94 = scmp.eq.s32.totalorder %s18, 1
      %p95 = por %p93, %p94
      %p97 = scmp.ne.s32.totalorder %s82, %s96
      %p98 = scmp.eq.s32.totalorder %s18, 0
      %p99 = por %p97, %p98
      %s100 = ssub.s32 %s19, %s31
      %s101 = ssub.s32 %s20, %s27
      %s102 = sor.u32 %s100, %s101
      %p103 = scmp.eq.s32.totalorder %s102, 0
      %s105 = sadd.s32 %s104, 1
      %s106 = scalar_select %p103, %s104, %s105
      %p109 = pneg %p103
      %p110 = scmp.eq.s32.totalorder %s12, 1
      %p111 = por %p109, %p110
      %p112 = scmp.ne.s32.totalorder %s104, %s107
      %p113 = scmp.eq.s32.totalorder %s12, 0
      %p114 = por %p112, %p113
      %p115 = scmp.ne.s32.totalorder %s104, %s107
      %p116 = scmp.eq.s32.totalorder %s17, 1
      %p117 = por %p115, %p116
      %p118 = scmp.ne.s32.totalorder %s107, %s108
      %p119 = scmp.eq.s32.totalorder %s17, 0
      %p120 = por %p118, %p119
      %p121 = scmp.ne.s32.totalorder %s107, %s108
      %p122 = scmp.eq.s32.totalorder %s18, 1
      %p123 = por %p121, %p122
      %p125 = scmp.ne.s32.totalorder %s108, %s124
      %p126 = scmp.eq.s32.totalorder %s18, 0
      %p127 = por %p125, %p126
      %p128 = scmp.le.s32.totalorder 1, %s12
      %p129 = scmp.lt.s32.totalorder %s12, 3
      %p130 = pnand %p128, %p129
      %p131 = pneg %p130
      // Predicated region
      $region9: #{tpu_custom_call.1} parent=5 // pred_check
        _
      $region10: #{tpu_custom_call.1} parent=5 // pred_check_branch
        %133 = sbr.rel (%p130) target = $region12
      $region11: #{tpu_custom_call.1} parent=5 // pred_region
        %s134 = ssub.s32 %s12, 1
        // Predicated region
        $region13: #{tpu_custom_call.1} parent=11 // pred_check
          %p135 = pneg %p50
        $region14: #{tpu_custom_call.1} parent=11 // pred_check_branch
          %137 = sbr.rel (%p135) target = $region16
        $region15: #{tpu_custom_call.1} parent=11 // pred_region
          %s138 = smul.u32 16, %s21
          %p139 = scmp.lt.s32.totalorder %s138, 15
          %s140 = scalar_select %p139, %s138, 15
          %s141 = smul.addr %s140, 8
          %s142 = scalar_lea.vmem %s0, %s141
          %s143 = smul.u32 16, %s21
        $region16: #{tpu_custom_call.1} parent=11 // pred_fallthru
          _
        // Predicated region
        $region17: #{tpu_custom_call.1} parent=11 // pred_check
          %p144 = pneg %p71
        $region18: #{tpu_custom_call.1} parent=11 // pred_check_branch
          %146 = sbr.rel (%p144) target = $region20
        $region19: #{tpu_custom_call.1} parent=11 // pred_region
          _
        $region20: #{tpu_custom_call.1} parent=11 // pred_fallthru
          _
        // Predicated region
        $region21: #{tpu_custom_call.1} parent=11 // pred_check
          %p147 = pneg %p92
        $region22: #{tpu_custom_call.1} parent=11 // pred_check_branch
          %149 = sbr.rel (%p147) target = $region24
        $region23: #{tpu_custom_call.1} parent=11 // pred_region
          _
        $region24: #{tpu_custom_call.1} parent=11 // pred_fallthru
          _
      $region12: #{tpu_custom_call.1} parent=5 // pred_fallthru
        _
      %p150 = scmp.lt.s32.totalorder %s12, 2
      // Predicated region
      $region25: #{tpu_custom_call.1} parent=5 // pred_check
        %p151 = pneg %p150
      $region26: #{tpu_custom_call.1} parent=5 // pred_check_branch
        %153 = sbr.rel (%p151) target = $region28
      $region27: #{tpu_custom_call.1} parent=5 // pred_region
        _
      $region28: #{tpu_custom_call.1} parent=5 // pred_fallthru
        _
      %p154 = scmp.le.s32.totalorder 1, %s12
      %p155 = scmp.lt.s32.totalorder %s12, 3
      %p156 = pnand %p154, %p155
      %p157 = pneg %p156
      // Predicated region
      $region29: #{tpu_custom_call.1} parent=5 // pred_check
        _
      $region30: #{tpu_custom_call.1} parent=5 // pred_check_branch
        %159 = sbr.rel (%p156) target = $region32
      $region31: #{tpu_custom_call.1} parent=5 // pred_region
        %s160 = ssub.s32 %s12, 1
        %s161 = smul.u32 16, %s21
        %p162 = scmp.lt.s32.totalorder %s161, 15
        %s163 = scalar_select %p162, %s161, 15
        %s164 = smul.addr %s163, 8
        %s165 = scalar_lea.vmem %s0, %s164
        %p166 = pneg %p50
        %p167 = pneg %p47
        %p168 = pneg %p71
        %p169 = pneg %p68
        %p170 = pneg %p92
        %p171 = pneg %p89
        %p172 = pneg %p120
        %p173 = pneg %p117
        %s174 = sand.u32 %s107, 1
        %s175 = scalar_lea.sflag [#allocation3], %s174
        %s176 = sand.u32 %s107, 1
        %s177 = smul.addr %s176, 128
        %s178 = scalar_lea.vmem [#allocation2], %s177
        %s179 = smul.u32 16, %s21
        %p180 = scmp.lt.s32.totalorder %s179, 15
        %s181 = scalar_select %p180, %s179, 15
        %s182 = smul.addr %s181, 8
        %s183 = scalar_lea.vmem %s0, %s182
        %s184 = smul.u32 16, %s21
        %s185 = smul.u32 16, %s21
        %v186 = vld [vmem:[%s183] sm:$0xff]
        %v187 = vld [vmem:[%s183 + $0x8] sm:$0xff]
        %v188 = vld [vmem:[%s183 + $0x10] sm:$0xff]
        %v189 = vld [vmem:[%s183 + $0x18] sm:$0xff]
        %v190 = vld [vmem:[%s183 + $0x20] sm:$0xff]
        %v191 = vld [vmem:[%s183 + $0x28] sm:$0xff]
        %v192 = vld [vmem:[%s183 + $0x30] sm:$0xff]
        %v193 = vld [vmem:[%s183 + $0x38] sm:$0xff]
        %v194 = vld [vmem:[%s183 + $0x40] sm:$0xff]
        %v195 = vld [vmem:[%s183 + $0x48] sm:$0xff]
        %v196 = vld [vmem:[%s183 + $0x50] sm:$0xff]
        %v197 = vld [vmem:[%s183 + $0x58] sm:$0xff]
        %v198 = vld [vmem:[%s183 + $0x60] sm:$0xff]
        %v199 = vld [vmem:[%s183 + $0x68] sm:$0xff]
        %v200 = vld [vmem:[%s183 + $0x70] sm:$0xff]
        %v201 = vld [vmem:[%s183 + $0x78] sm:$0xff]
        %s202 = smul.u32 %s22, 32
        %s203 = scalar_lea.vmem %s1, %s202
        %v204 = vld [vmem:[%s203] sm:$0xff]
        %v205 = vld [vmem:[%s203 + $0x8] sm:$0xff]
        %v206 = vld [vmem:[%s203 + $0x10] sm:$0xff]
        %v207 = vld [vmem:[%s203 + $0x18] sm:$0xff]
        %s208 = scalar_lea.vmem %s2, %s22
        %v209 = vld [vmem:[%s208] sm:$0x1]
        %v211 = vlaneseq
        %v212 = vshrl.u32 %v211, 7
        %v213 = vsub.s32 0, %v212
        %v214 = vrot.slane %v209, %v213
        %vm216 = vcmask 261120
        %v218 = vsel %vm216, %v186, 0
        %v221 = vsel %vm216, %v187, 0
        %v224 = vsel %vm216, %v188, 0
        %v227 = vsel %vm216, %v189, 0
        %v230 = vsel %vm216, %v190, 0
        %v233 = vsel %vm216, %v191, 0
        %v236 = vsel %vm216, %v192, 0
        %v239 = vsel %vm216, %v193, 0
        %v242 = vsel %vm216, %v194, 0
        %v245 = vsel %vm216, %v195, 0
        %v248 = vsel %vm216, %v196, 0
        %v251 = vsel %vm216, %v197, 0
        %v254 = vsel %vm216, %v198, 0
        %v257 = vsel %vm216, %v199, 0
        %v260 = vsel %vm216, %v200, 0
        %v263 = vsel %vm216, %v201, 0
        %265 = vmatprep.subr.mxu0 0.0
        %266 = vmatpush1.msra.mxu0 %v204
        %267 = vmatprep.subr.mxu0 0.0
        %268 = vmatpush1.msra.mxu0 %v205
        %269 = vmatprep.subr.mxu0 0.0
        %270 = vmatpush1.msra.mxu0 %v206
        %271 = vmatprep.subr.mxu0 0.0
        %272 = vmatpush1.msra.mxu0 %v207
        %273 = vmatprep.subr.mxu0 0.0
        %274 = vmatpush1.msra.mxu0 0.0
        %275 = vmatprep.subr.mxu0 0.0
        %276 = vmatpush1.msra.mxu0 0.0
        %277 = vmatprep.subr.mxu0 0.0
        %278 = vmatpush1.msra.mxu0 0.0
        %279 = vmatprep.subr.mxu0 0.0
        %280 = vmatpush1.msra.mxu0 0.0
        %281 = vmatprep.subr.mxu0 0.0
        %282 = vmatpush1.msra.mxu0 0.0
        %283 = vmatprep.subr.mxu0 0.0
        %284 = vmatpush1.msra.mxu0 0.0
        %285 = vmatprep.subr.mxu0 0.0
        %286 = vmatpush1.msra.mxu0 0.0
        %287 = vmatprep.subr.mxu0 0.0
        %288 = vmatpush1.msra.mxu0 0.0
        %289 = vmatprep.subr.mxu0 0.0
        %290 = vmatpush1.msra.mxu0 0.0
        %291 = vmatprep.subr.mxu0 0.0
        %292 = vmatpush1.msra.mxu0 0.0
        %293 = vmatprep.subr.mxu0 0.0
        %294 = vmatpush1.msra.mxu0 0.0
        %295 = vmatprep.subr.mxu0 0.0
        %296 = vmatpush1.msra.mxu0 0.0
        %297 = vmatprep.subr.mxu0 0.0
        %298 = vmatpush1.msra.mxu0 0.0
        %299 = vmatprep.subr.mxu0 0.0
        %300 = vmatpush1.msra.mxu0 0.0
        %301 = vmatprep.subr.mxu0 0.0
        %302 = vmatpush1.msra.mxu0 0.0
        %303 = vmatprep.subr.mxu0 0.0
        %304 = vmatpush1.msra.mxu0 0.0
        %305 = vmatprep.subr.mxu0 0.0
        %306 = vmatpush1.msra.mxu0 0.0
        %307 = vmatprep.subr.mxu0 0.0
        %308 = vmatpush1.msra.mxu0 0.0
        %309 = vmatprep.subr.mxu0 0.0
        %310 = vmatpush1.msra.mxu0 0.0
        %311 = vmatprep.subr.mxu0 0.0
        %312 = vmatpush1.msra.mxu0 0.0
        %313 = vmatprep.subr.mxu0 0.0
        %314 = vmatpush1.msra.mxu0 0.0
        %315 = vmatprep.subr.mxu0 0.0
        %316 = vmatpush1.msra.mxu0 0.0
        %317 = vmatprep.subr.mxu0 0.0
        %318 = vmatpush1.msra.mxu0 0.0
        %319 = vmatprep.subr.mxu0 0.0
        %320 = vmatpush1.msra.mxu0 0.0
        %321 = vmatprep.subr.mxu0 0.0
        %322 = vmatpush1.msra.mxu0 0.0
        %323 = vmatprep.subr.mxu0 0.0
        %324 = vmatpush1.msra.mxu0 0.0
        %325 = vmatprep.subr.mxu0 0.0
        %326 = vmatpush1.msra.mxu0 0.0
        %327 = vmatprep.subr.mxu0 0.0
        %328 = vmatpush1.msra.mxu0 0.0
        %329 = vmatprep.mubr.f32.mxu0 0.0
        %330 = vmatmul.mubr.f32.gmra.mrb[0].mxu0 %v218
        %v331 = vpop.f32.mrb[0].mxu0
        %v332 = vadd.f32 %v214, %v331
        %v333 = vpop.f32.mrb[0].mxu0
        %334 = vmatprep.mubr.f32.mxu0 0.0
        %335 = vmatmul.mubr.f32.gmra.mrb[0].mxu0 %v221
        %v336 = vpop.f32.mrb[0].mxu0
        %v337 = vadd.f32 %v214, %v336
        %v338 = vpop.f32.mrb[0].mxu0
        %339 = vmatprep.mubr.f32.mxu0 0.0
        %340 = vmatmul.mubr.f32.gmra.mrb[0].mxu0 %v224
        %v341 = vpop.f32.mrb[0].mxu0
        %v342 = vadd.f32 %v214, %v341
        %v343 = vpop.f32.mrb[0].mxu0
        %344 = vmatprep.mubr.f32.mxu0 0.0
        %345 = vmatmul.mubr.f32.gmra.mrb[0].mxu0 %v227
        %v346 = vpop.f32.mrb[0].mxu0
        %v347 = vadd.f32 %v214, %v346
        %v348 = vpop.f32.mrb[0].mxu0
        %349 = vmatprep.mubr.f32.mxu0 0.0
        %350 = vmatmul.mubr.f32.gmra.mrb[0].mxu0 %v230
        %v351 = vpop.f32.mrb[0].mxu0
        %v352 = vadd.f32 %v214, %v351
        %v353 = vpop.f32.mrb[0].mxu0
        %354 = vmatprep.mubr.f32.mxu0 0.0
        %355 = vmatmul.mubr.f32.gmra.mrb[0].mxu0 %v233
        %v356 = vpop.f32.mrb[0].mxu0
        %v357 = vadd.f32 %v214, %v356
        %v358 = vpop.f32.mrb[0].mxu0
        %359 = vmatprep.mubr.f32.mxu0 0.0
        %360 = vmatmul.mubr.f32.gmra.mrb[0].mxu0 %v236
        %v361 = vpop.f32.mrb[0].mxu0
        %v362 = vadd.f32 %v214, %v361
        %v363 = vpop.f32.mrb[0].mxu0
        %364 = vmatprep.mubr.f32.mxu0 0.0
        %365 = vmatmul.mubr.f32.gmra.mrb[0].mxu0 %v239
        %v366 = vpop.f32.mrb[0].mxu0
        %v367 = vadd.f32 %v214, %v366
        %v368 = vpop.f32.mrb[0].mxu0
        %369 = vmatprep.mubr.f32.mxu0 0.0
        %370 = vmatmul.mubr.f32.gmra.mrb[0].mxu0 %v242
        %v371 = vpop.f32.mrb[0].mxu0
        %v372 = vadd.f32 %v214, %v371
        %v373 = vpop.f32.mrb[0].mxu0
        %374 = vmatprep.mubr.f32.mxu0 0.0
        %375 = vmatmul.mubr.f32.gmra.mrb[0].mxu0 %v245
        %v376 = vpop.f32.mrb[0].mxu0
        %v377 = vadd.f32 %v214, %v376
        %v378 = vpop.f32.mrb[0].mxu0
        %379 = vmatprep.mubr.f32.mxu0 0.0
        %380 = vmatmul.mubr.f32.gmra.mrb[0].mxu0 %v248
        %v381 = vpop.f32.mrb[0].mxu0
        %v382 = vadd.f32 %v214, %v381
        %v383 = vpop.f32.mrb[0].mxu0
        %384 = vmatprep.mubr.f32.mxu0 0.0
        %385 = vmatmul.mubr.f32.gmra.mrb[0].mxu0 %v251
        %v386 = vpop.f32.mrb[0].mxu0
        %v387 = vadd.f32 %v214, %v386
        %v388 = vpop.f32.mrb[0].mxu0
        %389 = vmatprep.mubr.f32.mxu0 0.0
        %390 = vmatmul.mubr.f32.gmra.mrb[0].mxu0 %v254
        %v391 = vpop.f32.mrb[0].mxu0
        %v392 = vadd.f32 %v214, %v391
        %v393 = vpop.f32.mrb[0].mxu0
        %394 = vmatprep.mubr.f32.mxu0 0.0
        %395 = vmatmul.mubr.f32.gmra.mrb[0].mxu0 %v257
        %v396 = vpop.f32.mrb[0].mxu0
        %v397 = vadd.f32 %v214, %v396
        %v398 = vpop.f32.mrb[0].mxu0
        %399 = vmatprep.mubr.f32.mxu0 0.0
        %400 = vmatmul.mubr.f32.gmra.mrb[0].mxu0 %v260
        %v401 = vpop.f32.mrb[0].mxu0
        %v402 = vadd.f32 %v214, %v401
        %v403 = vpop.f32.mrb[0].mxu0
        %404 = vmatprep.mubr.f32.mxu0 0.0
        %405 = vmatmul.mubr.f32.gmra.mrb[0].mxu0 %v263
        %v406 = vpop.f32.mrb[0].mxu0
        %v407 = vadd.f32 %v214, %v406
        %v408 = vpop.f32.mrb[0].mxu0
        %409 = vdwg.mxu0
        %410 = vst.msk [vmem:[%s178] sm:$0xff] %vm216, %v332
        %411 = vst.msk [vmem:[%s178 + $0x8] sm:$0xff] %vm216, %v337
        %412 = vst.msk [vmem:[%s178 + $0x10] sm:$0xff] %vm216, %v342
        %413 = vst.msk [vmem:[%s178 + $0x18] sm:$0xff] %vm216, %v347
        %414 = vst.msk [vmem:[%s178 + $0x20] sm:$0xff] %vm216, %v352
        %415 = vst.msk [vmem:[%s178 + $0x28] sm:$0xff] %vm216, %v357
        %416 = vst.msk [vmem:[%s178 + $0x30] sm:$0xff] %vm216, %v362
        %417 = vst.msk [vmem:[%s178 + $0x38] sm:$0xff] %vm216, %v367
        %418 = vst.msk [vmem:[%s178 + $0x40] sm:$0xff] %vm216, %v372
        %419 = vst.msk [vmem:[%s178 + $0x48] sm:$0xff] %vm216, %v377
        %420 = vst.msk [vmem:[%s178 + $0x50] sm:$0xff] %vm216, %v382
        %421 = vst.msk [vmem:[%s178 + $0x58] sm:$0xff] %vm216, %v387
        %422 = vst.msk [vmem:[%s178 + $0x60] sm:$0xff] %vm216, %v392
        %423 = vst.msk [vmem:[%s178 + $0x68] sm:$0xff] %vm216, %v397
        %424 = vst.msk [vmem:[%s178 + $0x70] sm:$0xff] %vm216, %v402
        %425 = vst.msk [vmem:[%s178 + $0x78] sm:$0xff] %vm216, %v407
        %s426 = sand.u32 %s107, 1
        %s427 = scalar_lea.sflag [#allocation3], %s426
        %s428 = sand.u32 %s107, 1
        %s429 = smul.addr %s428, 128
        %s430 = scalar_lea.vmem [#allocation2], %s429
        // Predicated region
        $region33: #{tpu_custom_call.1} parent=31 // pred_check
          %p431 = pneg %p117
        $region34: #{tpu_custom_call.1} parent=31 // pred_check_branch
          %433 = sbr.rel (%p431) target = $region36
        $region35: #{tpu_custom_call.1} parent=31 // pred_region
          %s434 = smul.u32 16, %s21
          %s436 = ssub.s32 2048, 2048
          %437 = vsyncadd %s427, %s436
          %s438 = smul.addr %s434, 2
          %s439 = sadd.s32 %s22, %s438
          %s440 = smul.addr %s439, 128
          %s441 = scalar_lea.hbm %s3, %s440
          %s442 = sshll.u32 %s430, 4
          %s443 = int_to_ptr.vmem [resolvable:$true] %s442
          %448 = dma.vmem_to_hbm [thread:$0]  %s443, 2048, %s441, %s427, 128, 256, 8
        $region36: #{tpu_custom_call.1} parent=31 // pred_fallthru
          _
      $region32: #{tpu_custom_call.1} parent=5 // pred_fallthru
        _
      %p449 = scmp.le.s32.totalorder 2, %s12
      // Predicated region
      $region37: #{tpu_custom_call.1} parent=5 // pred_check
        %p450 = pneg %p449
      $region38: #{tpu_custom_call.1} parent=5 // pred_check_branch
        %452 = sbr.rel (%p450) target = $region40
      $region39: #{tpu_custom_call.1} parent=5 // pred_region
        %s453 = ssub.s32 %s12, 2
        // Predicated region
        $region41: #{tpu_custom_call.1} parent=39 // pred_check
          %p454 = pneg %p123
        $region42: #{tpu_custom_call.1} parent=39 // pred_check_branch
          %456 = sbr.rel (%p454) target = $region44
        $region43: #{tpu_custom_call.1} parent=39 // pred_region
          %s457 = sand.u32 %s108, 1
          %s458 = scalar_lea.sflag [#allocation3], %s457
          %s459 = sand.u32 %s108, 1
          %s460 = smul.addr %s459, 128
          %s461 = scalar_lea.vmem [#allocation2], %s460
          %462 = dma.done %s458, 2048
        $region44: #{tpu_custom_call.1} parent=39 // pred_fallthru
          _
      $region40: #{tpu_custom_call.1} parent=5 // pred_fallthru
        _
    $region6: #{tpu_custom_call.1} parent=1 // loop_footer
      %s16 = sadd.s32 1, %s12
    $region7: #{tpu_custom_call.1} parent=1 // loop_footer_branch
      %11 = sbr.rel target = $region3
    $region8: #{tpu_custom_call.1} parent=1 // loop_exit
      _
    %463 = vsyncpa [#allocation3], 1
    %s464 = scalar_lea.sflag [#allocation3], 1
    %465 = vsyncpa %s464, 1

</llo_original>
